<compile_context>
chip_gen: v5e
topology: v5e:2x2
jax: 0.10.0
libtpu: 0.0.40
codegen_flags: <defaults>
</compile_context>

<pallas_src>
import jax
import jax.numpy as jnp
from jax.experimental import pallas as pl
from jax.experimental.pallas import tpu as pltpu

_LANE_CANDIDATES = (1024, 512, 256, 128)   # multiples of 128, largest first
_SMALL_INPUT_ELEMS = 1 << 16               # below this, plain jnp is faster
_MIN_PARALLEL_BLOCKS = 8                   # target blocks for megacore (v7x)
_MIN_BLOCK_BYTES = 256 << 10               # don't shrink blocks below this
                                           # just to create parallelism


def _clip_kernel(x_ref, o1_ref, o2_ref, o3_ref):
    x = x_ref[...]
    dt = x.dtype
    lo1 = jnp.asarray(0.3, dt)
    lo2 = jnp.asarray(0.5, dt)
    hi2 = jnp.asarray(0.7, dt)
    hi3 = jnp.asarray(0.8, dt)
    # x1 = clamp(min=0.3)
    o1_ref[...] = jnp.maximum(x, lo1)
    # x2 = clamp(min=0.5, max=0.7)
    o2_ref[...] = jnp.minimum(jnp.maximum(x, lo2), hi2)
    # x3 = clamp(max=0.8)
    o3_ref[...] = jnp.minimum(x, hi3)


def _clip_jnp(x):
    dt = x.dtype
    return (jnp.maximum(x, jnp.asarray(0.3, dt)),
            jnp.clip(x, jnp.asarray(0.5, dt), jnp.asarray(0.7, dt)),
            jnp.minimum(x, jnp.asarray(0.8, dt)))


def _sublane_for(itemsize):
    # f32 -> 8 rows/vreg, bf16/f16 -> 16, int8/fp8 -> 32
    return 8 * max(1, 4 // itemsize)


def _default_block_bytes():
    """Per-generation block-byte budget (pipeline footprint ~= 8x this)."""
    try:
        kind = jax.devices()[0].device_kind.lower()
    except Exception:
        return 1 << 20
    if "v5 lite" in kind or "v5e" in kind or "v5lite" in kind:
        # v5e: 16 MiB scoped-VMEM default -> keep footprint at ~8 MiB.
        return 1 << 20
    # v6e / v7x (and unknown newer): 2 MiB blocks -> 16 MiB footprint,
    # inside the 32 MiB scoped default and v7x's 64 MiB per-TC VMEM.
    return 2 << 20


def _pick_layout(n_elems, sublane):
    """Largest LANE (multiple of 128) dividing n_elems with rows % sublane == 0."""
    for lane in _LANE_CANDIDATES:
        if n_elems % lane != 0:
            continue
        rows = n_elems // lane
        if rows % sublane == 0:
            return lane, rows
    return None, None


def clip_forward(x, *, block_bytes=None, use_pallas=None):
    """Applies the three clamps of Model.forward via a single Pallas kernel.

    block_bytes: target bytes per (input) block buffer; None -> per-generation
                 default (1 MiB on v5e, 2 MiB on v6e/v7x).
    use_pallas:  None -> auto (jnp fallback for tiny / unfactorizable /
                 non-float inputs); True/False -> force the choice.
    """
    orig_shape = x.shape
    dtype = x.dtype
    n_elems = x.size

    floating = jnp.issubdtype(dtype, jnp.floating)
    if use_pallas is None:
        use_pallas = floating and n_elems >= _SMALL_INPUT_ELEMS
    if not use_pallas or n_elems == 0 or not floating:
        return _clip_jnp(x)

    itemsize = jnp.dtype(dtype).itemsize
    sublane = _sublane_for(itemsize)

    lane, rows = _pick_layout(n_elems, sublane)
    if lane is None:
        # No copy-free lane-dense factorization; a pad/slice round-trip would
        # triple HBM traffic, so let fused XLA elementwise ops handle it.
        return _clip_jnp(x)

    x2d = x.reshape(rows, lane)   # contiguous reshape: no data movement

    if block_bytes is None:
        block_bytes = _default_block_bytes()

    # Rows per block from the byte budget, sublane-aligned.
    tr_cap = (block_bytes // (lane * itemsize)) // sublane * sublane
    tr_cap = max(sublane, tr_cap)

    # Keep >= _MIN_PARALLEL_BLOCKS blocks (for v7x megacore) as long as each
    # block still holds >= _MIN_BLOCK_BYTES; harmless on single-TC chips.
    min_tr = max(sublane,
                 (_MIN_BLOCK_BYTES // (lane * itemsize)) // sublane * sublane)
    if rows >= _MIN_PARALLEL_BLOCKS * min_tr:
        tr_par = max(min_tr, (rows // _MIN_PARALLEL_BLOCKS) // sublane * sublane)
        tr = min(tr_cap, tr_par)
    else:
        tr = tr_cap
    tr = min(tr, rows)

    grid = (pl.cdiv(rows, tr),)

    spec = pl.BlockSpec((tr, lane), lambda i: (i, 0))
    out_sd = jax.ShapeDtypeStruct((rows, lane), dtype)

    cost = pl.CostEstimate(
        flops=4 * n_elems,                      # 2 max + 2 min per element
        transcendentals=0,
        bytes_accessed=4 * n_elems * itemsize,  # 1 read + 3 writes
    )

    o1, o2, o3 = pl.pallas_call(
        _clip_kernel,
        out_shape=(out_sd, out_sd, out_sd),
        grid=grid,
        in_specs=[spec],
        out_specs=(spec, spec, spec),
        compiler_params=pltpu.CompilerParams(
            dimension_semantics=("parallel",),
        ),
        cost_estimate=cost,
    )(x2d)

    return (o1.reshape(orig_shape),
            o2.reshape(orig_shape),
            o3.reshape(orig_shape))


if __name__ == "__main__":
    key = jax.random.PRNGKey(0)
    # Small input consistent with an elementwise module; NCHW-ish shape.
    x = jax.random.uniform(key, (2, 4, 16, 16), dtype=jnp.float32)

    # Force the Pallas path so the kernel itself is exercised even at this
    # demo size (auto mode would use the jnp fallback for tiny inputs).
    x1, x2, x3 = clip_forward(x, use_pallas=True)
    jax.block_until_ready((x1, x2, x3))

    # Reference check in plain JAX (mirrors torch.clamp semantics).
    r1 = jnp.maximum(x, 0.3)
    r2 = jnp.clip(x, 0.5, 0.7)
    r3 = jnp.minimum(x, 0.8)
    assert x1.shape == x.shape and x2.shape == x.shape and x3.shape == x.shape
    assert jnp.allclose(x1, r1), "x1 mismatch"
    assert jnp.allclose(x2, r2), "x2 mismatch"
    assert jnp.allclose(x3, r3), "x3 mismatch"

    print("KERNEL_OK")
</pallas_src>

<mosaic_0001>
module attributes {stable_mosaic.version = 11 : i64} {
  func.func @_clip_kernel(%arg0: i32, %arg1: memref<8x256xf32, #tpu.memory_space<vmem>>, %arg2: memref<8x256xf32, #tpu.memory_space<vmem>>, %arg3: memref<8x256xf32, #tpu.memory_space<vmem>>, %arg4: memref<8x256xf32, #tpu.memory_space<vmem>>) attributes {dimension_semantics = [#tpu.dimension_semantics<parallel>], iteration_bounds = array<i64: 1>, scalar_prefetch = 0 : i64, scratch_operands = 0 : i64, tpu.core_type = #tpu.core_type<tc>, window_params = [{transform_indices = @transform_0, window_bounds = array<i64: 8, 256>}, {transform_indices = @transform_1, window_bounds = array<i64: 8, 256>}, {transform_indices = @transform_2, window_bounds = array<i64: 8, 256>}, {transform_indices = @transform_3, window_bounds = array<i64: 8, 256>}]} {
    %c0 = arith.constant 0 : index
    %c0_0 = arith.constant 0 : index
    %0 = vector.load %arg1[%c0, %c0_0] : memref<8x256xf32, #tpu.memory_space<vmem>>, vector<8x256xf32>
    %cst = arith.constant 3.000000e-01 : f32
    %1 = vector.broadcast %cst : f32 to vector<8x256xf32>
    %2 = arith.maximumf %0, %1 : vector<8x256xf32>
    %c0_1 = arith.constant 0 : index
    %c0_2 = arith.constant 0 : index
    %3 = vector.load %arg2[%c0_1, %c0_2] : memref<8x256xf32, #tpu.memory_space<vmem>>, vector<8x256xf32>
    tpu.vector_store %arg2[%c0_1, %c0_2], %2 {strides = array<i32>} : memref<8x256xf32, #tpu.memory_space<vmem>>, vector<8x256xf32>,
    %cst_3 = arith.constant 5.000000e-01 : f32
    %4 = vector.broadcast %cst_3 : f32 to vector<8x256xf32>
    %5 = arith.maximumf %0, %4 : vector<8x256xf32>
    %cst_4 = arith.constant 0.699999988 : f32
    %6 = vector.broadcast %cst_4 : f32 to vector<8x256xf32>
    %7 = arith.minimumf %5, %6 : vector<8x256xf32>
    %c0_5 = arith.constant 0 : index
    %c0_6 = arith.constant 0 : index
    %8 = vector.load %arg3[%c0_5, %c0_6] : memref<8x256xf32, #tpu.memory_space<vmem>>, vector<8x256xf32>
    tpu.vector_store %arg3[%c0_5, %c0_6], %7 {strides = array<i32>} : memref<8x256xf32, #tpu.memory_space<vmem>>, vector<8x256xf32>,
    %cst_7 = arith.constant 8.000000e-01 : f32
    %9 = vector.broadcast %cst_7 : f32 to vector<8x256xf32>
    %10 = arith.minimumf %0, %9 : vector<8x256xf32>
    %c0_8 = arith.constant 0 : index
    %c0_9 = arith.constant 0 : index
    %11 = vector.load %arg4[%c0_8, %c0_9] : memref<8x256xf32, #tpu.memory_space<vmem>>, vector<8x256xf32>
    tpu.vector_store %arg4[%c0_8, %c0_9], %10 {strides = array<i32>} : memref<8x256xf32, #tpu.memory_space<vmem>>, vector<8x256xf32>,
    return
  }
  func.func @transform_0(%arg0: i32) -> (i32, i32) {
    %c0_i32 = arith.constant 0 : i32
    %c0_i32_0 = arith.constant 0 : i32
    return %arg0, %c0_i32 : i32, i32
  }
  func.func @transform_1(%arg0: i32) -> (i32, i32) {
    %c0_i32 = arith.constant 0 : i32
    %c0_i32_0 = arith.constant 0 : i32
    return %arg0, %c0_i32 : i32, i32
  }
  func.func @transform_2(%arg0: i32) -> (i32, i32) {
    %c0_i32 = arith.constant 0 : i32
    %c0_i32_0 = arith.constant 0 : i32
    return %arg0, %c0_i32 : i32, i32
  }
  func.func @transform_3(%arg0: i32) -> (i32, i32) {
    %c0_i32 = arith.constant 0 : i32
    %c0_i32_0 = arith.constant 0 : i32
    return %arg0, %c0_i32 : i32, i32
  }
}

</mosaic_0001>

<llo_original>
// kernel: tpu_custom_call.1
$region0: #{tpu_custom_call.1}
  #allocation0 [shape = 'u32[]', space=smem, size = 0x4, offset = 0x4, fixed_abs, tag = 'smem constant byte address 0x4 - core index']
  #allocation1 [shape = 'u32[72,128]{1,0:T(1,128)}', space=vmem, size = 0x9000, scoped, tag = 'internal scratch']
  %s0 = inlined_call_operand.hbm [shape: f32[8,256], index: 0, kind: input, shape index: {}]
  %s1 = inlined_call_operand.hbm [shape: f32[8,256], index: 1, kind: output, shape index: {0}]
  %s2 = inlined_call_operand.hbm [shape: f32[8,256], index: 2, kind: output, shape index: {1}]
  %s3 = inlined_call_operand.hbm [shape: f32[8,256], index: 3, kind: output, shape index: {2}]
  %4 = xla_tuple %s1, %s2, %s3
  %s5 = sld [smem:[#allocation0]]
  $region34: #{tpu_custom_call.1} parent=0
    _
  %s7 = ssub.s32 1, %s5
  %s8 = scalar_select 0, %s7, %s5
  $region1: #{tpu_custom_call.1} parent=0
    #allocation2 [shape = 'u8[8192]{0}', space=vmem, size = 0x2000, scoped, tag = 'input window, operand 0, single buffered']
    #allocation3 [shape = 's32[1]{0}', space=sflag, size = 0x4, scoped, tag = 'scoped memory for tpu_custom_call.1']
    #allocation4 [shape = 's32[1]{0}', space=sflag, size = 0x4, scoped, tag = 'scoped memory for tpu_custom_call.1']
    #allocation5 [shape = 'u8[8192]{0}', space=vmem, size = 0x2000, scoped, tag = 'output window, operand 0, single buffered']
    #allocation6 [shape = 'u8[8192]{0}', space=vmem, size = 0x2000, scoped, tag = 'output window, operand 1, single buffered']
    #allocation7 [shape = 's32[1]{0}', space=sflag, size = 0x4, scoped, tag = 'scoped memory for tpu_custom_call.1']
    #allocation8 [shape = 'u8[8192]{0}', space=vmem, size = 0x2000, scoped, tag = 'output window, operand 2, single buffered']
    %9 = vsyncpa [#allocation3], 0
    %10 = vsyncpa [#allocation4], 0
    %11 = vsyncpa [#allocation7], 0
    // Predicated region
    $region2: #{tpu_custom_call.1} parent=1 // pred_check
      _
    $region3: #{tpu_custom_call.1} parent=1 // pred_check_branch
      %13 = sbr.rel (0) target = $region5
    $region4: #{tpu_custom_call.1} parent=1 // pred_region
      %15 = vsyncadd [#allocation3], 0
      %s17 = sshll.u32 %s0, 4
      %s18 = int_to_ptr.hbm [resolvable:$true] %s17
      %s19 = sshll.u32 [#allocation2], 4
      %s20 = int_to_ptr.vmem [resolvable:$true] %s19
      %22 = dma.hbm_to_vmem [thread:$0]  %s18, 256, %s20, [#allocation3]
    $region5: #{tpu_custom_call.1} parent=1 // pred_fallthru
      _
    // Predicated region
    $region6: #{tpu_custom_call.1} parent=1 // pred_check
      _
    $region7: #{tpu_custom_call.1} parent=1 // pred_check_branch
      %24 = sbr.rel (0) target = $region9
    $region8: #{tpu_custom_call.1} parent=1 // pred_region
      %26 = dma.done [#allocation3], 256
    $region9: #{tpu_custom_call.1} parent=1 // pred_fallthru
      _
    %v27 = vld [vmem:[#allocation2] sm:$0xff]
    %v28 = vld [vmem:[#allocation2 + $0x8] sm:$0xff]
    %v29 = vmax.f32 %v27, 0.3
    %v30 = vmax.f32 %v28, 0.3
    %31 = vst [vmem:[#allocation5] sm:$0xff] %v29
    %32 = vst [vmem:[#allocation5 + $0x8] sm:$0xff] %v30
    %v33 = vmax.f32 %v27, 0.5
    %v34 = vmax.f32 %v28, 0.5
    %v35 = vmin.f32 %v33, 0.7
    %v36 = vmin.f32 %v34, 0.7
    %37 = vst [vmem:[#allocation6] sm:$0xff] %v35
    %38 = vst [vmem:[#allocation6 + $0x8] sm:$0xff] %v36
    %v39 = vmin.f32 %v27, 0.8
    %v40 = vmin.f32 %v28, 0.8
    %41 = vst [vmem:[#allocation8] sm:$0xff] %v39
    %42 = vst [vmem:[#allocation8 + $0x8] sm:$0xff] %v40
    // Predicated region
    $region10: #{tpu_custom_call.1} parent=1 // pred_check
      _
    $region11: #{tpu_custom_call.1} parent=1 // pred_check_branch
      %44 = sbr.rel (0) target = $region13
    $region12: #{tpu_custom_call.1} parent=1 // pred_region
      %46 = vsyncadd [#allocation4], 0
      %s48 = sshll.u32 [#allocation5], 4
      %s49 = int_to_ptr.vmem [resolvable:$true] %s48
      %s50 = sshll.u32 %s1, 4
      %s51 = int_to_ptr.hbm [resolvable:$true] %s50
      %53 = dma.vmem_to_hbm [thread:$0]  %s49, 256, %s51, [#allocation4]
    $region13: #{tpu_custom_call.1} parent=1 // pred_fallthru
      _
    // Predicated region
    $region14: #{tpu_custom_call.1} parent=1 // pred_check
      _
    $region15: #{tpu_custom_call.1} parent=1 // pred_check_branch
      %55 = sbr.rel (0) target = $region17
    $region16: #{tpu_custom_call.1} parent=1 // pred_region
      %57 = vsyncadd [#allocation7], 0
      %s59 = sshll.u32 [#allocation6], 4
      %s60 = int_to_ptr.vmem [resolvable:$true] %s59
      %s61 = sshll.u32 %s2, 4
      %s62 = int_to_ptr.hbm [resolvable:$true] %s61
      %64 = dma.vmem_to_hbm [thread:$0]  %s60, 256, %s62, [#allocation7]
    $region17: #{tpu_custom_call.1} parent=1 // pred_fallthru
      _
    // Predicated region
    $region18: #{tpu_custom_call.1} parent=1 // pred_check
      _
    $region19: #{tpu_custom_call.1} parent=1 // pred_check_branch
      %66 = sbr.rel (0) target = $region21
    $region20: #{tpu_custom_call.1} parent=1 // pred_region
      %68 = vsyncadd [#allocation7], 0
      %s70 = sshll.u32 [#allocation8], 4
      %s71 = int_to_ptr.vmem [resolvable:$true] %s70
      %s72 = sshll.u32 %s3, 4
      %s73 = int_to_ptr.hbm [resolvable:$true] %s72
      %75 = dma.vmem_to_hbm [thread:$0]  %s71, 256, %s73, [#allocation7]
    $region21: #{tpu_custom_call.1} parent=1 // pred_fallthru
      _
    // Predicated region
    $region22: #{tpu_custom_call.1} parent=1 // pred_check
      _
    $region23: #{tpu_custom_call.1} parent=1 // pred_check_branch
      %77 = sbr.rel (0) target = $region25
    $region24: #{tpu_custom_call.1} parent=1 // pred_region
      %79 = dma.done [#allocation4], 256
    $region25: #{tpu_custom_call.1} parent=1 // pred_fallthru
      _
    // Predicated region
    $region26: #{tpu_custom_call.1} parent=1 // pred_check
      _
    $region27: #{tpu_custom_call.1} parent=1 // pred_check_branch
      %81 = sbr.rel (0) target = $region29
    $region28: #{tpu_custom_call.1} parent=1 // pred_region
      %83 = dma.done [#allocation7], 256
    $region29: #{tpu_custom_call.1} parent=1 // pred_fallthru
      _
    // Predicated region
    $region30: #{tpu_custom_call.1} parent=1 // pred_check
      _
    $region31: #{tpu_custom_call.1} parent=1 // pred_check_branch
      %85 = sbr.rel (0) target = $region33
    $region32: #{tpu_custom_call.1} parent=1 // pred_region
      %87 = dma.done [#allocation7], 256
    $region33: #{tpu_custom_call.1} parent=1 // pred_fallthru
      _
    %88 = vsyncpa [#allocation3], 1
    %89 = vsyncpa [#allocation4], 1
    %90 = vsyncpa [#allocation7], 1

</llo_original>
